<compile_context>
chip_gen: v7x
topology: tpu7x:2x2x1
jax: 0.10.0
libtpu: 0.0.40
codegen_flags: <defaults>
</compile_context>

<pallas_src>
import numpy as np
import jax
import jax.numpy as jnp
from jax.experimental import pallas as pl
from jax.experimental.pallas import tpu as pltpu


# ----------------------------------------------------------------------------
# Pallas kernel: one (pair p, batch b) attention block, channels-first layout.
# ----------------------------------------------------------------------------
def vsa_kernel(xkv_ref, xq_ref, wvk_ref, bvk_ref, wq_ref, bq_ref, p_ref, out_ref):
    # xkv_ref/xq_ref : (C, N) bf16    flattened width block (channels-first)
    # wvk_ref        : (C+Ckp, C) bf16  rows [0:C]=conv_v, [C:C+Ck]=conv_k, rest 0
    # bvk_ref        : (C+Ckp, 1) f32
    # wq_ref/bq_ref  : (Ckp, C) bf16 / (Ckp, 1) f32   (zero-padded Q conv)
    # p_ref          : (Nk_pad, N) bf16  AvgPool2d as averaging matrix (zero-padded rows)
    # out_ref        : (C, N) f32
    C = out_ref.shape[0]

    # fused V & K 1x1 convolutions (per-pixel matmul), bias added before pooling
    vkf = jnp.dot(wvk_ref[...], xkv_ref[...],
                  preferred_element_type=jnp.float32) + bvk_ref[...]        # (C+Ckp, N)
    # Q projection of the neighbouring width block
    qf = jnp.dot(wq_ref[...], xq_ref[...],
                 preferred_element_type=jnp.float32) + bq_ref[...]          # (Ckp, N)

    # AvgPool2d(kernel=(4s,s), stride=(s,4s)) as one matmul over the spatial axis:
    # vkp[i, k] = sum_n vkf[i, n] * P[k, n]   (contract lane axis of both, no .T)
    vkp = jax.lax.dot_general(
        vkf.astype(jnp.bfloat16), p_ref[...],
        (((1,), (1,)), ((), ())), preferred_element_type=jnp.float32)       # (C+Ckp, Nkp)
    vp = vkp[:C, :]        # (C, Nkp)   pooled V ; padded key columns are exactly 0
    kp = vkp[C:, :]        # (Ckp, Nkp) pooled K ; padded channel rows are 0

    # transposed logits: L[k, n] = sum_c kp[c, k] * qf[c, n]   (lane-dense, N last)
    logits = jax.lax.dot_general(
        kp.astype(jnp.bfloat16), qf.astype(jnp.bfloat16),
        (((0,), (0,)), ((), ())), preferred_element_type=jnp.float32)       # (Nkp, N)

    # softmax over the QUERY axis (torch softmax dim=1), now the lane axis, in f32
    m = jnp.max(logits, axis=1, keepdims=True)                              # (Nkp, 1)
    e = jnp.exp(logits - m)                                                 # (Nkp, N)
    s = jnp.sum(e, axis=1, keepdims=True)                                   # (Nkp, 1)
    att_t = e * pl.reciprocal(s, approx=True)                               # (Nkp, N)

    # out = V_pie @ attention^T ; zero V columns kill the padded attention rows
    out_ref[...] = jnp.dot(vp.astype(jnp.bfloat16), att_t.astype(jnp.bfloat16),
                           preferred_element_type=jnp.float32)              # (C, N)


# ----------------------------------------------------------------------------
# Host-side glue: pooling matrix construction, weight packing, layout plumbing.
# ----------------------------------------------------------------------------
def make_vsa_pool_matrix(H, Wb, scale):
    """AvgPool2d(kernel=(4*scale, scale), stride=(scale, 4*scale)) on a (H, Wb)
    plane, as a (Nk, H*Wb) averaging matrix over the row-major index n = h*Wb + w."""
    kh, kw = 4 * scale, scale
    sh, sw = scale, 4 * scale
    Kh = (H - kh) // sh + 1
    Kw = (Wb - kw) // sw + 1
    P = np.zeros((Kh * Kw, H * Wb), dtype=np.float32)
    inv = 1.0 / float(kh * kw)
    for i in range(Kh):
        for j in range(Kw):
            for r in range(i * sh, i * sh + kh):
                for c in range(j * sw, j * sw + kw):
                    P[i * Kw + j, r * Wb + c] = inv
    return P


def vsa_model_forward(x, params):
    """x: (B, C, H, W) f32 NCHW. params[p] has PyTorch-convention 1x1 conv weights:
    wk/wq: (C//8, C), wv: (C, C), bk/bq: (C//8,), bv: (C,). Returns (B, C, H, W)."""
    B, C, H, W = x.shape
    Wb = W // 4
    N = H * Wb
    Ck = params[0]['wk'].shape[0]
    Ck_pad = max(8, ((Ck + 7) // 8) * 8)
    scales = (1, 2, 4, 8)

    # ---- pack weights / biases / pooling matrices, stacked per attention pair ----
    pmats = [make_vsa_pool_matrix(H, Wb, s) for s in scales]
    Nk_pad = ((max(pm.shape[0] for pm in pmats) + 7) // 8) * 8
    P = np.zeros((4, Nk_pad, N), np.float32)
    wvk = np.zeros((4, C + Ck_pad, C), np.float32)
    bvk = np.zeros((4, C + Ck_pad, 1), np.float32)
    wqs = np.zeros((4, Ck_pad, C), np.float32)
    bqs = np.zeros((4, Ck_pad, 1), np.float32)
    for p in range(4):
        q = (p + 1) % 4
        P[p, :pmats[p].shape[0], :] = pmats[p]
        wvk[p, :C, :] = np.asarray(params[p]['wv'])
        wvk[p, C:C + Ck, :] = np.asarray(params[p]['wk'])
        bvk[p, :C, 0] = np.asarray(params[p]['bv'])
        bvk[p, C:C + Ck, 0] = np.asarray(params[p]['bk'])
        wqs[p, :Ck, :] = np.asarray(params[q]['wq'])
        bqs[p, :Ck, 0] = np.asarray(params[q]['bq'])

    wvk_j = jnp.asarray(wvk, jnp.bfloat16)
    wq_j = jnp.asarray(wqs, jnp.bfloat16)
    P_j = jnp.asarray(P, jnp.bfloat16)     # pooling weights are powers of 2: exact in bf16
    bvk_j = jnp.asarray(bvk, jnp.float32)
    bq_j = jnp.asarray(bqs, jnp.float32)

    # ---- activations: channels-first, flattened spatial axis (lane-dense), bf16 ----
    xb = x.astype(jnp.bfloat16)
    blocks = [xb[:, :, :, p * Wb:(p + 1) * Wb].reshape(B, C, N) for p in range(4)]
    x_kv = jnp.stack(blocks, axis=0)                                    # (4, B, C, N)
    x_q = jnp.stack([blocks[(p + 1) % 4] for p in range(4)], axis=0)    # (4, B, C, N)

    out = pl.pallas_call(
        vsa_kernel,
        out_shape=jax.ShapeDtypeStruct((4, B, C, N), jnp.float32),
        grid=(4, B),
        in_specs=[
            pl.BlockSpec((None, None, C, N), lambda p, b: (p, b, 0, 0)),    # x (K/V src)
            pl.BlockSpec((None, None, C, N), lambda p, b: (p, b, 0, 0)),    # x (Q src)
            pl.BlockSpec((None, C + Ck_pad, C), lambda p, b: (p, 0, 0)),    # fused wv|wk
            pl.BlockSpec((None, C + Ck_pad, 1), lambda p, b: (p, 0, 0)),    # fused bv|bk
            pl.BlockSpec((None, Ck_pad, C), lambda p, b: (p, 0, 0)),        # wq
            pl.BlockSpec((None, Ck_pad, 1), lambda p, b: (p, 0, 0)),        # bq
            pl.BlockSpec((None, Nk_pad, N), lambda p, b: (p, 0, 0)),        # pool matrix
        ],
        out_specs=pl.BlockSpec((None, None, C, N), lambda p, b: (p, b, 0, 0)),
        compiler_params=pltpu.CompilerParams(
            dimension_semantics=("parallel", "parallel")),
    )(x_kv, x_q, wvk_j, bvk_j, wq_j, bq_j, P_j)                             # (4, B, C, N)

    # interleave the four width blocks back: (4,B,C,H,Wb) -> (B,C,H,4,Wb) -> (B,C,H,W)
    out = out.reshape(4, B, C, H, Wb)
    return jnp.transpose(out, (1, 2, 3, 0, 4)).reshape(B, C, H, W)


# ----------------------------------------------------------------------------
# Pure-JAX f32 reference (mirrors the PyTorch module op-for-op) for verification.
# ----------------------------------------------------------------------------
def vsa_model_reference(x, params):
    B, C, H, W = x.shape
    Wb = W // 4
    scales = [1, 2, 4, 8]

    def conv1x1(xb, w, b):   # w: (Cout, Cin), b: (Cout,)
        return jnp.einsum('bchw,dc->bdhw', xb, w) + b.reshape(1, -1, 1, 1)

    def avg_pool_vsa(xb, scale):
        kh, kw = 4 * scale, scale
        sh, sw = scale, 4 * scale
        s = jax.lax.reduce_window(xb, 0.0, jax.lax.add,
                                  (1, 1, kh, kw), (1, 1, sh, sw), 'VALID')
        return s / float(kh * kw)

    outs = []
    for p in range(4):
        q_idx = (p + 1) % 4
        blk = x[:, :, :, p * Wb:(p + 1) * Wb]
        blkq = x[:, :, :, q_idx * Wb:(q_idx + 1) * Wb]
        K = conv1x1(blk, params[p]['wk'], params[p]['bk'])
        V = conv1x1(blk, params[p]['wv'], params[p]['bv'])
        Q = conv1x1(blkq, params[q_idx]['wq'], params[q_idx]['bq'])
        Kp = avg_pool_vsa(K, scales[p])
        Vp = avg_pool_vsa(V, scales[p])
        Bq, Cq, Hq, Wq = Q.shape
        Q_pie = Q.reshape(Bq, Cq, Hq * Wq).transpose(0, 2, 1)
        K_pie = Kp.reshape(B, Kp.shape[1], -1)
        V_pie = Vp.reshape(B, Vp.shape[1], -1)
        att = jax.nn.softmax(jnp.einsum('bnc,bck->bnk', Q_pie, K_pie), axis=1)
        att = att.transpose(0, 2, 1)
        o = jnp.einsum('bck,bkn->bcn', V_pie, att).reshape(B, -1, Hq, Wq)
        outs.append(o)
    return jnp.concatenate(outs, axis=3)


# ----------------------------------------------------------------------------
if __name__ == "__main__":
    key = jax.random.PRNGKey(0)
    B, C, H, W = 2, 16, 32, 32        # in_dim=16 -> Ck = 2 ; Wb = 8 (scale=8 fits)
    Ck = C // 8

    keys = jax.random.split(key, 1 + 4 * 6)
    x = jax.random.normal(keys[0], (B, C, H, W), dtype=jnp.float32)

    # 4 KQVConv blocks, PyTorch weight convention (Cout, Cin) for 1x1 convs
    params = []
    ki = 1
    for p in range(4):
        d = {}
        d['wk'] = jax.random.normal(keys[ki], (Ck, C), jnp.float32) * 0.1; ki += 1
        d['bk'] = jax.random.normal(keys[ki], (Ck,), jnp.float32) * 0.01; ki += 1
        d['wq'] = jax.random.normal(keys[ki], (Ck, C), jnp.float32) * 0.1; ki += 1
        d['bq'] = jax.random.normal(keys[ki], (Ck,), jnp.float32) * 0.01; ki += 1
        d['wv'] = jax.random.normal(keys[ki], (C, C), jnp.float32) * 0.1; ki += 1
        d['bv'] = jax.random.normal(keys[ki], (C,), jnp.float32) * 0.01; ki += 1
        params.append(d)

    out = jax.block_until_ready(vsa_model_forward(x, params))
    assert out.shape == (B, C, H, W), out.shape

    ref = jax.block_until_ready(vsa_model_reference(x, params))
    if not np.allclose(np.asarray(out), np.asarray(ref), atol=2e-2, rtol=2e-2):
        err = float(np.max(np.abs(np.asarray(out) - np.asarray(ref))))
        raise AssertionError(f"Pallas kernel does not match reference (max abs err {err:.3e})")

    print("KERNEL_OK")
</pallas_src>

<mosaic_0001>
module attributes {stable_mosaic.version = 11 : i64} {
  func.func @vsa_kernel(%arg0: i32, %arg1: i32, %arg2: memref<1x1x16x256xbf16, #tpu.memory_space<vmem>>, %arg3: memref<1x1x16x256xbf16, #tpu.memory_space<vmem>>, %arg4: memref<1x24x16xbf16, #tpu.memory_space<vmem>>, %arg5: memref<1x24x1xf32, #tpu.memory_space<vmem>>, %arg6: memref<1x8x16xbf16, #tpu.memory_space<vmem>>, %arg7: memref<1x8x1xf32, #tpu.memory_space<vmem>>, %arg8: memref<1x64x256xbf16, #tpu.memory_space<vmem>>, %arg9: memref<1x1x16x256xf32, #tpu.memory_space<vmem>>) attributes {dimension_semantics = [#tpu.dimension_semantics<parallel>, #tpu.dimension_semantics<parallel>], iteration_bounds = array<i64: 4, 2>, scalar_prefetch = 0 : i64, scratch_operands = 0 : i64, tpu.core_type = #tpu.core_type<tc>, window_params = [{transform_indices = @transform_0, window_bounds = array<i64: 1, 1, 16, 256>}, {transform_indices = @transform_1, window_bounds = array<i64: 1, 1, 16, 256>}, {transform_indices = @transform_2, window_bounds = array<i64: 1, 24, 16>}, {transform_indices = @transform_3, window_bounds = array<i64: 1, 24, 1>}, {transform_indices = @transform_4, window_bounds = array<i64: 1, 8, 16>}, {transform_indices = @transform_5, window_bounds = array<i64: 1, 8, 1>}, {transform_indices = @transform_6, window_bounds = array<i64: 1, 64, 256>}, {transform_indices = @transform_7, window_bounds = array<i64: 1, 1, 16, 256>}]} {
    %c0 = arith.constant 0 : index
    %c0_0 = arith.constant 0 : index
    %c0_1 = arith.constant 0 : index
    %0 = vector.load %arg4[%c0, %c0_0, %c0_1] : memref<1x24x16xbf16, #tpu.memory_space<vmem>>, vector<1x24x16xbf16>
    %1 = vector.shape_cast %0 : vector<1x24x16xbf16> to vector<24x16xbf16>
    %c0_2 = arith.constant 0 : index
    %c0_3 = arith.constant 0 : index
    %c0_4 = arith.constant 0 : index
    %c0_5 = arith.constant 0 : index
    %2 = vector.load %arg2[%c0_2, %c0_3, %c0_4, %c0_5] : memref<1x1x16x256xbf16, #tpu.memory_space<vmem>>, vector<1x1x16x256xbf16>
    %3 = vector.shape_cast %2 : vector<1x1x16x256xbf16> to vector<16x256xbf16>
    %cst = arith.constant dense<0.000000e+00> : vector<24x256xf32>
    %4 = tpu.matmul %1, %3, %cst {dimension_numbers = #tpu.dot_dimension_numbers<[1], [0], [0], [1], [0, 0, 1, 1], [], []>} : vector<24x16xbf16>, vector<16x256xbf16>, vector<24x256xf32> -> vector<24x256xf32>
    %c0_6 = arith.constant 0 : index
    %c0_7 = arith.constant 0 : index
    %c0_8 = arith.constant 0 : index
    %5 = vector.load %arg5[%c0_6, %c0_7, %c0_8] : memref<1x24x1xf32, #tpu.memory_space<vmem>>, vector<1x24x1xf32>
    %6 = vector.shape_cast %5 : vector<1x24x1xf32> to vector<24x1xf32>
    %7 = vector.broadcast %6 : vector<24x1xf32> to vector<24x256xf32>
    %8 = arith.addf %4, %7 : vector<24x256xf32>
    %c0_9 = arith.constant 0 : index
    %c0_10 = arith.constant 0 : index
    %c0_11 = arith.constant 0 : index
    %9 = vector.load %arg6[%c0_9, %c0_10, %c0_11] : memref<1x8x16xbf16, #tpu.memory_space<vmem>>, vector<1x8x16xbf16>
    %10 = vector.shape_cast %9 : vector<1x8x16xbf16> to vector<8x16xbf16>
    %c0_12 = arith.constant 0 : index
    %c0_13 = arith.constant 0 : index
    %c0_14 = arith.constant 0 : index
    %c0_15 = arith.constant 0 : index
    %11 = vector.load %arg3[%c0_12, %c0_13, %c0_14, %c0_15] : memref<1x1x16x256xbf16, #tpu.memory_space<vmem>>, vector<1x1x16x256xbf16>
    %12 = vector.shape_cast %11 : vector<1x1x16x256xbf16> to vector<16x256xbf16>
    %cst_16 = arith.constant dense<0.000000e+00> : vector<8x256xf32>
    %13 = tpu.matmul %10, %12, %cst_16 {dimension_numbers = #tpu.dot_dimension_numbers<[1], [0], [0], [1], [0, 0, 1, 1], [], []>} : vector<8x16xbf16>, vector<16x256xbf16>, vector<8x256xf32> -> vector<8x256xf32>
    %c0_17 = arith.constant 0 : index
    %c0_18 = arith.constant 0 : index
    %c0_19 = arith.constant 0 : index
    %14 = vector.load %arg7[%c0_17, %c0_18, %c0_19] : memref<1x8x1xf32, #tpu.memory_space<vmem>>, vector<1x8x1xf32>
    %15 = vector.shape_cast %14 : vector<1x8x1xf32> to vector<8x1xf32>
    %16 = vector.broadcast %15 : vector<8x1xf32> to vector<8x256xf32>
    %17 = arith.addf %13, %16 : vector<8x256xf32>
    %18 = arith.truncf %8 : vector<24x256xf32> to vector<24x256xbf16>
    %c0_20 = arith.constant 0 : index
    %c0_21 = arith.constant 0 : index
    %c0_22 = arith.constant 0 : index
    %19 = vector.load %arg8[%c0_20, %c0_21, %c0_22] : memref<1x64x256xbf16, #tpu.memory_space<vmem>>, vector<1x64x256xbf16>
    %20 = vector.shape_cast %19 : vector<1x64x256xbf16> to vector<64x256xbf16>
    %cst_23 = arith.constant dense<0.000000e+00> : vector<24x64xf32>
    %21 = tpu.matmul %18, %20, %cst_23 {dimension_numbers = #tpu.dot_dimension_numbers<[1], [1], [0], [0], [0, 0, 1, 0], [], []>} : vector<24x256xbf16>, vector<64x256xbf16>, vector<24x64xf32> -> vector<24x64xf32>
    %22 = vector.extract_strided_slice %21 {offsets = [0, 0], sizes = [16, 64], strides = [1, 1]} : vector<24x64xf32> to vector<16x64xf32>
    %23 = vector.extract_strided_slice %21 {offsets = [16, 0], sizes = [8, 64], strides = [1, 1]} : vector<24x64xf32> to vector<8x64xf32>
    %24 = arith.truncf %23 : vector<8x64xf32> to vector<8x64xbf16>
    %25 = arith.truncf %17 : vector<8x256xf32> to vector<8x256xbf16>
    %cst_24 = arith.constant dense<0.000000e+00> : vector<64x256xf32>
    %26 = tpu.matmul %24, %25, %cst_24 {dimension_numbers = #tpu.dot_dimension_numbers<[0], [0], [1], [1], [0, 1, 1, 1], [], []>} : vector<8x64xbf16>, vector<8x256xbf16>, vector<64x256xf32> -> vector<64x256xf32>
    %cst_25 = arith.constant dense<0xFF800000> : vector<64xf32>
    %27 = vector.multi_reduction <maximumf>, %26, %cst_25 [1] : vector<64x256xf32> to vector<64xf32>
    %28 = vector.shape_cast %27 : vector<64xf32> to vector<64x1xf32>
    %29 = vector.broadcast %28 : vector<64x1xf32> to vector<64x256xf32>
    %30 = arith.subf %26, %29 : vector<64x256xf32>
    %31 = math.exp %30 : vector<64x256xf32>
    %cst_26 = arith.constant dense<0.000000e+00> : vector<64xf32>
    %32 = vector.multi_reduction <add>, %31, %cst_26 [1] : vector<64x256xf32> to vector<64xf32>
    %33 = vector.shape_cast %32 : vector<64xf32> to vector<64x1xf32>
    %34 = tpu.reciprocal %33 {approx = true} : vector<64x1xf32> -> vector<64x1xf32>
    %35 = vector.broadcast %34 : vector<64x1xf32> to vector<64x256xf32>
    %36 = arith.mulf %31, %35 : vector<64x256xf32>
    %37 = arith.truncf %22 : vector<16x64xf32> to vector<16x64xbf16>
    %38 = arith.truncf %36 : vector<64x256xf32> to vector<64x256xbf16>
    %cst_27 = arith.constant dense<0.000000e+00> : vector<16x256xf32>
    %39 = tpu.matmul %37, %38, %cst_27 {dimension_numbers = #tpu.dot_dimension_numbers<[1], [0], [0], [1], [0, 0, 1, 1], [], []>} : vector<16x64xbf16>, vector<64x256xbf16>, vector<16x256xf32> -> vector<16x256xf32>
    %c0_28 = arith.constant 0 : index
    %c0_29 = arith.constant 0 : index
    %c0_30 = arith.constant 0 : index
    %c0_31 = arith.constant 0 : index
    %40 = vector.load %arg9[%c0_28, %c0_29, %c0_30, %c0_31] : memref<1x1x16x256xf32, #tpu.memory_space<vmem>>, vector<1x1x16x256xf32>
    %41 = vector.shape_cast %40 : vector<1x1x16x256xf32> to vector<16x256xf32>
    %42 = vector.shape_cast %39 : vector<16x256xf32> to vector<1x1x16x256xf32>
    tpu.vector_store %arg9[%c0_28, %c0_29, %c0_30, %c0_31], %42 {strides = array<i32>} : memref<1x1x16x256xf32, #tpu.memory_space<vmem>>, vector<1x1x16x256xf32>,
    return
  }
  func.func @transform_0(%arg0: i32, %arg1: i32) -> (i32, i32, i32, i32) {
    %c0_i32 = arith.constant 0 : i32
    %c0_i32_0 = arith.constant 0 : i32
    %c0_i32_1 = arith.constant 0 : i32
    return %arg0, %arg1, %c0_i32, %c0_i32_0 : i32, i32, i32, i32
  }
  func.func @transform_1(%arg0: i32, %arg1: i32) -> (i32, i32, i32, i32) {
    %c0_i32 = arith.constant 0 : i32
    %c0_i32_0 = arith.constant 0 : i32
    %c0_i32_1 = arith.constant 0 : i32
    return %arg0, %arg1, %c0_i32, %c0_i32_0 : i32, i32, i32, i32
  }
  func.func @transform_2(%arg0: i32, %arg1: i32) -> (i32, i32, i32) {
    %c0_i32 = arith.constant 0 : i32
    %c0_i32_0 = arith.constant 0 : i32
    %c0_i32_1 = arith.constant 0 : i32
    return %arg0, %c0_i32, %c0_i32_0 : i32, i32, i32
  }
  func.func @transform_3(%arg0: i32, %arg1: i32) -> (i32, i32, i32) {
    %c0_i32 = arith.constant 0 : i32
    %c0_i32_0 = arith.constant 0 : i32
    %c0_i32_1 = arith.constant 0 : i32
    return %arg0, %c0_i32, %c0_i32_0 : i32, i32, i32
  }
  func.func @transform_4(%arg0: i32, %arg1: i32) -> (i32, i32, i32) {
    %c0_i32 = arith.constant 0 : i32
    %c0_i32_0 = arith.constant 0 : i32
    %c0_i32_1 = arith.constant 0 : i32
    return %arg0, %c0_i32, %c0_i32_0 : i32, i32, i32
  }
  func.func @transform_5(%arg0: i32, %arg1: i32) -> (i32, i32, i32) {
    %c0_i32 = arith.constant 0 : i32
    %c0_i32_0 = arith.constant 0 : i32
    %c0_i32_1 = arith.constant 0 : i32
    return %arg0, %c0_i32, %c0_i32_0 : i32, i32, i32
  }
  func.func @transform_6(%arg0: i32, %arg1: i32) -> (i32, i32, i32) {
    %c0_i32 = arith.constant 0 : i32
    %c0_i32_0 = arith.constant 0 : i32
    %c0_i32_1 = arith.constant 0 : i32
    return %arg0, %c0_i32, %c0_i32_0 : i32, i32, i32
  }
  func.func @transform_7(%arg0: i32, %arg1: i32) -> (i32, i32, i32, i32) {
    %c0_i32 = arith.constant 0 : i32
    %c0_i32_0 = arith.constant 0 : i32
    %c0_i32_1 = arith.constant 0 : i32
    return %arg0, %arg1, %c0_i32, %c0_i32_0 : i32, i32, i32, i32
  }
}

</mosaic_0001>

<llo_original>
// kernel: tpu_custom_call.1
$region0: #{tpu_custom_call.1}
  #allocation0 [shape = 'u32[]', space=smem, size = 0x4, offset = 0x4, fixed_abs, tag = 'smem constant byte address 0x4 - core index']
  #allocation1 [shape = 'u32[144,128]{1,0:T(1,128)}', space=vmem, size = 0x12000, scoped, tag = 'internal scratch']
  %s0 = inlined_call_operand.vmem [shape: bf16[4,2,16,256], index: 0, kind: input, shape index: {}]
  %s1 = inlined_call_operand.hbm [shape: bf16[4,2,16,256], index: 1, kind: input, shape index: {}]
  %s2 = inlined_call_operand.vmem [shape: bf16[4,24,16], index: 2, kind: input, shape index: {}]
  %s3 = inlined_call_operand.vmem [shape: f32[4,24,1], index: 3, kind: input, shape index: {}]
  %s4 = inlined_call_operand.vmem [shape: bf16[4,8,16], index: 4, kind: input, shape index: {}]
  %s5 = inlined_call_operand.vmem [shape: f32[4,8,1], index: 5, kind: input, shape index: {}]
  %s6 = inlined_call_operand.hbm [shape: bf16[4,64,256], index: 6, kind: input, shape index: {}]
  %s7 = inlined_call_operand.hbm [shape: f32[4,2,16,256], index: 7, kind: output, shape index: {}]
  %s8 = sld [smem:[#allocation0]]
  $region69: #{tpu_custom_call.1} parent=0
    _
  %s10 = ssub.s32 1, %s8
  %s11 = scalar_select 0, %s10, %s8
  $region1: #{tpu_custom_call.1} parent=0
    #allocation2 [shape = 'u8[16384]{0}', space=vmem, size = 0x4000, scoped, tag = 'input window, operand 1']
    #allocation3 [shape = 's32[2]{0}', space=sflag, size = 0x8, scoped, tag = 'scoped memory for tpu_custom_call.1']
    #allocation4 [shape = 's32[2]{0}', space=sflag, size = 0x8, scoped, tag = 'scoped memory for tpu_custom_call.1']
    #allocation5 [shape = 'u8[65536]{0}', space=vmem, size = 0x10000, scoped, tag = 'input window, operand 6']
    #allocation6 [shape = 's32[2]{0}', space=sflag, size = 0x8, scoped, tag = 'scoped memory for tpu_custom_call.1']
    #allocation7 [shape = 'u8[32768]{0}', space=vmem, size = 0x8000, scoped, tag = 'output window, operand 0']
    %12 = vsyncpa [#allocation3], 0
    %s13 = scalar_lea.sflag [#allocation3], 1
    %14 = vsyncpa %s13, 0
    %15 = vsyncpa [#allocation6], 0
    %s16 = scalar_lea.sflag [#allocation6], 1
    %17 = vsyncpa %s16, 0
    %18 = vsyncpa [#allocation4], 0
    %s19 = scalar_lea.sflag [#allocation4], 1
    %20 = vsyncpa %s19, 0
    loop: start=0, step=1, limit=10
    $region2: #{tpu_custom_call.1} parent=1 // loop_pre_header
      _
    $region3: #{tpu_custom_call.1} parent=1 // loop_header
      %s22 = sphi 0, %s26
      %p23 = scmp.ge.s32.totalorder %s22, 10
      %s29 = sphi 0, %s41
      %s30 = sphi 0, %s37
      %s31 = sphi 0, %s29
      %s32 = sphi 0, %s30
      %s33 = sphi 0, %s31
      %s34 = sphi 0, %s32
      %s46 = sphi 0, %s48
      %s49 = sphi 0, %s46
      %s50 = sphi 0, %s49
      %s66 = sphi 0, %s50
      %s74 = sphi 0, %s76
      %s77 = sphi 0, %s74
      %s78 = sphi 0, %s77
      %s94 = sphi 0, %s78
      %s100 = sphi 0, %s102
      %s103 = sphi 0, %s100
      %s104 = sphi 0, %s103
      %s120 = sphi 0, %s104
      %s126 = sphi 0, %s128
      %s129 = sphi 0, %s126
      %s130 = sphi 0, %s129
      %s146 = sphi 0, %s130
      %s152 = sphi 0, %s154
      %s155 = sphi 0, %s152
      %s156 = sphi 0, %s155
      %s172 = sphi 0, %s156
      %s178 = sphi 0, %s180
      %s181 = sphi 0, %s178
      %s182 = sphi 0, %s181
      %s198 = sphi 0, %s182
      %s204 = sphi 0, %s206
      %s207 = sphi 0, %s204
      %s208 = sphi 0, %s207
      %s224 = sphi 0, %s208
      %s232 = sphi 0, %s234
      %s235 = sphi 0, %s232
      %s236 = sphi 0, %s235
      %s252 = sphi 0, %s236
    $region4: #{tpu_custom_call.1} parent=1 // loop_header_branch
      %25 = sbr.rel (%p23) target = $region8
    $region5: #{tpu_custom_call.1} parent=1 // loop_body
      %s27 = ssub.s32 %s22, 1
      %s28 = ssub.s32 %s22, 2
      %s35 = sadd.s32 1, %s30
      %p36 = scmp.ge.s32.totalorder %s35, 2
      %s37 = scalar_select %p36, 0, %s35
      %s38 = sadd.s32 1, %s29
      %s39 = scalar_select %p36, %s38, %s29
      %p40 = scmp.ge.s32.totalorder %s39, 4
      %s41 = scalar_select %p40, 0, %s39
      %s42 = ssub.s32 %s29, %s41
      %s43 = ssub.s32 %s30, %s37
      %s44 = sor.u32 %s42, %s43
      %p45 = scmp.eq.s32.totalorder %s44, 0
      %s47 = sadd.s32 %s46, 1
      %s48 = scalar_select %p45, %s46, %s47
      %p51 = pneg %p45
      %p52 = scmp.eq.s32.totalorder %s22, 7
      %p53 = por %p51, %p52
      %p54 = scmp.ne.s32.totalorder %s46, %s49
      %p55 = scmp.eq.s32.totalorder %s22, 0
      %p56 = por %p54, %p55
      %p57 = scmp.ne.s32.totalorder %s46, %s49
      %p58 = scmp.eq.s32.totalorder %s27, 7
      %p59 = por %p57, %p58
      %p60 = scmp.ne.s32.totalorder %s49, %s50
      %p61 = scmp.eq.s32.totalorder %s27, 0
      %p62 = por %p60, %p61
      %p63 = scmp.ne.s32.totalorder %s49, %s50
      %p64 = scmp.eq.s32.totalorder %s28, 7
      %p65 = por %p63, %p64
      %p67 = scmp.ne.s32.totalorder %s50, %s66
      %p68 = scmp.eq.s32.totalorder %s28, 0
      %p69 = por %p67, %p68
      %s70 = ssub.s32 %s29, %s41
      %s71 = ssub.s32 %s30, %s37
      %s72 = sor.u32 %s70, %s71
      %p73 = scmp.eq.s32.totalorder %s72, 0
      %s75 = sadd.s32 %s74, 1
      %s76 = scalar_select %p73, %s74, %s75
      %p79 = pneg %p73
      %p80 = scmp.eq.s32.totalorder %s22, 7
      %p81 = por %p79, %p80
      %p82 = scmp.ne.s32.totalorder %s74, %s77
      %p83 = scmp.eq.s32.totalorder %s22, 0
      %p84 = por %p82, %p83
      %p85 = scmp.ne.s32.totalorder %s74, %s77
      %p86 = scmp.eq.s32.totalorder %s27, 7
      %p87 = por %p85, %p86
      %p88 = scmp.ne.s32.totalorder %s77, %s78
      %p89 = scmp.eq.s32.totalorder %s27, 0
      %p90 = por %p88, %p89
      %p91 = scmp.ne.s32.totalorder %s77, %s78
      %p92 = scmp.eq.s32.totalorder %s28, 7
      %p93 = por %p91, %p92
      %p95 = scmp.ne.s32.totalorder %s78, %s94
      %p96 = scmp.eq.s32.totalorder %s28, 0
      %p97 = por %p95, %p96
      %s98 = ssub.s32 %s29, %s41
      %p99 = scmp.eq.s32.totalorder %s98, 0
      %s101 = sadd.s32 %s100, 1
      %s102 = scalar_select %p99, %s100, %s101
      %p105 = pneg %p99
      %p106 = scmp.eq.s32.totalorder %s22, 7
      %p107 = por %p105, %p106
      %p108 = scmp.ne.s32.totalorder %s100, %s103
      %p109 = scmp.eq.s32.totalorder %s22, 0
      %p110 = por %p108, %p109
      %p111 = scmp.ne.s32.totalorder %s100, %s103
      %p112 = scmp.eq.s32.totalorder %s27, 7
      %p113 = por %p111, %p112
      %p114 = scmp.ne.s32.totalorder %s103, %s104
      %p115 = scmp.eq.s32.totalorder %s27, 0
      %p116 = por %p114, %p115
      %p117 = scmp.ne.s32.totalorder %s103, %s104
      %p118 = scmp.eq.s32.totalorder %s28, 7
      %p119 = por %p117, %p118
      %p121 = scmp.ne.s32.totalorder %s104, %s120
      %p122 = scmp.eq.s32.totalorder %s28, 0
      %p123 = por %p121, %p122
      %s124 = ssub.s32 %s29, %s41
      %p125 = scmp.eq.s32.totalorder %s124, 0
      %s127 = sadd.s32 %s126, 1
      %s128 = scalar_select %p125, %s126, %s127
      %p131 = pneg %p125
      %p132 = scmp.eq.s32.totalorder %s22, 7
      %p133 = por %p131, %p132
      %p134 = scmp.ne.s32.totalorder %s126, %s129
      %p135 = scmp.eq.s32.totalorder %s22, 0
      %p136 = por %p134, %p135
      %p137 = scmp.ne.s32.totalorder %s126, %s129
      %p138 = scmp.eq.s32.totalorder %s27, 7
      %p139 = por %p137, %p138
      %p140 = scmp.ne.s32.totalorder %s129, %s130
      %p141 = scmp.eq.s32.totalorder %s27, 0
      %p142 = por %p140, %p141
      %p143 = scmp.ne.s32.totalorder %s129, %s130
      %p144 = scmp.eq.s32.totalorder %s28, 7
      %p145 = por %p143, %p144
      %p147 = scmp.ne.s32.totalorder %s130, %s146
      %p148 = scmp.eq.s32.totalorder %s28, 0
      %p149 = por %p147, %p148
      %s150 = ssub.s32 %s29, %s41
      %p151 = scmp.eq.s32.totalorder %s150, 0
      %s153 = sadd.s32 %s152, 1
      %s154 = scalar_select %p151, %s152, %s153
      %p157 = pneg %p151
      %p158 = scmp.eq.s32.totalorder %s22, 7
      %p159 = por %p157, %p158
      %p160 = scmp.ne.s32.totalorder %s152, %s155
      %p161 = scmp.eq.s32.totalorder %s22, 0
      %p162 = por %p160, %p161
      %p163 = scmp.ne.s32.totalorder %s152, %s155
      %p164 = scmp.eq.s32.totalorder %s27, 7
      %p165 = por %p163, %p164
      %p166 = scmp.ne.s32.totalorder %s155, %s156
      %p167 = scmp.eq.s32.totalorder %s27, 0
      %p168 = por %p166, %p167
      %p169 = scmp.ne.s32.totalorder %s155, %s156
      %p170 = scmp.eq.s32.totalorder %s28, 7
      %p171 = por %p169, %p170
      %p173 = scmp.ne.s32.totalorder %s156, %s172
      %p174 = scmp.eq.s32.totalorder %s28, 0
      %p175 = por %p173, %p174
      %s176 = ssub.s32 %s29, %s41
      %p177 = scmp.eq.s32.totalorder %s176, 0
      %s179 = sadd.s32 %s178, 1
      %s180 = scalar_select %p177, %s178, %s179
      %p183 = pneg %p177
      %p184 = scmp.eq.s32.totalorder %s22, 7
      %p185 = por %p183, %p184
      %p186 = scmp.ne.s32.totalorder %s178, %s181
      %p187 = scmp.eq.s32.totalorder %s22, 0
      %p188 = por %p186, %p187
      %p189 = scmp.ne.s32.totalorder %s178, %s181
      %p190 = scmp.eq.s32.totalorder %s27, 7
      %p191 = por %p189, %p190
      %p192 = scmp.ne.s32.totalorder %s181, %s182
      %p193 = scmp.eq.s32.totalorder %s27, 0
      %p194 = por %p192, %p193
      %p195 = scmp.ne.s32.totalorder %s181, %s182
      %p196 = scmp.eq.s32.totalorder %s28, 7
      %p197 = por %p195, %p196
      %p199 = scmp.ne.s32.totalorder %s182, %s198
      %p200 = scmp.eq.s32.totalorder %s28, 0
      %p201 = por %p199, %p200
      %s202 = ssub.s32 %s29, %s41
      %p203 = scmp.eq.s32.totalorder %s202, 0
      %s205 = sadd.s32 %s204, 1
      %s206 = scalar_select %p203, %s204, %s205
      %p209 = pneg %p203
      %p210 = scmp.eq.s32.totalorder %s22, 7
      %p211 = por %p209, %p210
      %p212 = scmp.ne.s32.totalorder %s204, %s207
      %p213 = scmp.eq.s32.totalorder %s22, 0
      %p214 = por %p212, %p213
      %p215 = scmp.ne.s32.totalorder %s204, %s207
      %p216 = scmp.eq.s32.totalorder %s27, 7
      %p217 = por %p215, %p216
      %p218 = scmp.ne.s32.totalorder %s207, %s208
      %p219 = scmp.eq.s32.totalorder %s27, 0
      %p220 = por %p218, %p219
      %p221 = scmp.ne.s32.totalorder %s207, %s208
      %p222 = scmp.eq.s32.totalorder %s28, 7
      %p223 = por %p221, %p222
      %p225 = scmp.ne.s32.totalorder %s208, %s224
      %p226 = scmp.eq.s32.totalorder %s28, 0
      %p227 = por %p225, %p226
      %s228 = ssub.s32 %s29, %s41
      %s229 = ssub.s32 %s30, %s37
      %s230 = sor.u32 %s228, %s229
      %p231 = scmp.eq.s32.totalorder %s230, 0
      %s233 = sadd.s32 %s232, 1
      %s234 = scalar_select %p231, %s232, %s233
      %p237 = pneg %p231
      %p238 = scmp.eq.s32.totalorder %s22, 7
      %p239 = por %p237, %p238
      %p240 = scmp.ne.s32.totalorder %s232, %s235
      %p241 = scmp.eq.s32.totalorder %s22, 0
      %p242 = por %p240, %p241
      %p243 = scmp.ne.s32.totalorder %s232, %s235
      %p244 = scmp.eq.s32.totalorder %s27, 7
      %p245 = por %p243, %p244
      %p246 = scmp.ne.s32.totalorder %s235, %s236
      %p247 = scmp.eq.s32.totalorder %s27, 0
      %p248 = por %p246, %p247
      %p249 = scmp.ne.s32.totalorder %s235, %s236
      %p250 = scmp.eq.s32.totalorder %s28, 7
      %p251 = por %p249, %p250
      %p253 = scmp.ne.s32.totalorder %s236, %s252
      %p254 = scmp.eq.s32.totalorder %s28, 0
      %p255 = por %p253, %p254
      %p256 = scmp.le.s32.totalorder 1, %s22
      %p257 = scmp.lt.s32.totalorder %s22, 9
      %p258 = pnand %p256, %p257
      %p259 = pneg %p258
      // Predicated region
      $region9: #{tpu_custom_call.1} parent=5 // pred_check
        _
      $region10: #{tpu_custom_call.1} parent=5 // pred_check_branch
        %261 = sbr.rel (%p258) target = $region12
      $region11: #{tpu_custom_call.1} parent=5 // pred_region
        %s262 = ssub.s32 %s22, 1
      $region12: #{tpu_custom_call.1} parent=5 // pred_fallthru
        _
      %p263 = scmp.lt.s32.totalorder %s22, 8
      // Predicated region
      $region13: #{tpu_custom_call.1} parent=5 // pred_check
        %p264 = pneg %p263
      $region14: #{tpu_custom_call.1} parent=5 // pred_check_branch
        %266 = sbr.rel (%p264) target = $region16
      $region15: #{tpu_custom_call.1} parent=5 // pred_region
        // Predicated region
        $region17: #{tpu_custom_call.1} parent=15 // pred_check
          %p267 = pneg %p56
        $region18: #{tpu_custom_call.1} parent=15 // pred_check_branch
          %269 = sbr.rel (%p267) target = $region20
        $region19: #{tpu_custom_call.1} parent=15 // pred_region
          %p270 = scmp.lt.s32.totalorder %s29, 3
          %s271 = scalar_select %p270, %s29, 3
          %p272 = scmp.lt.s32.totalorder %s30, 1
          %s273 = scalar_select %p272, %s30, 1
          %s274 = smul.addr %s273, 4
          %s275 = smul.addr %s271, 8
          %s276 = sadd.s32 %s274, %s275
          %s277 = smul.addr %s276, 4
          %s278 = scalar_lea.vmem %s0, %s277
        $region20: #{tpu_custom_call.1} parent=15 // pred_fallthru
          _
        // Predicated region
        $region21: #{tpu_custom_call.1} parent=15 // pred_check
          %p279 = pneg %p84
        $region22: #{tpu_custom_call.1} parent=15 // pred_check_branch
          %281 = sbr.rel (%p279) target = $region24
        $region23: #{tpu_custom_call.1} parent=15 // pred_region
          %s282 = sand.u32 %s74, 1
          %s283 = scalar_lea.sflag [#allocation3], %s282
          %s284 = sand.u32 %s74, 1
          %s285 = smul.addr %s284, 16
          %s286 = scalar_lea.vmem [#allocation2], %s285
          %s288 = ssub.s32 256, 256
          %289 = vsyncadd %s283, %s288
          %s290 = smul.addr %s30, 4
          %s291 = smul.addr %s29, 8
          %s292 = sadd.s32 %s290, %s291
          %s293 = smul.addr %s292, 64
          %s294 = scalar_lea.hbm %s1, %s293
          %s295 = sshll.u32 %s286, 4
          %s296 = int_to_ptr.vmem [resolvable:$true] %s295
          %301 = dma.hbm_to_vmem [thread:$0]  %s294, 256, %s296, %s283, 128, 128, 8
        $region24: #{tpu_custom_call.1} parent=15 // pred_fallthru
          _
        // Predicated region
        $region25: #{tpu_custom_call.1} parent=15 // pred_check
          %p302 = pneg %p110
        $region26: #{tpu_custom_call.1} parent=15 // pred_check_branch
          %304 = sbr.rel (%p302) target = $region28
        $region27: #{tpu_custom_call.1} parent=15 // pred_region
          %p305 = scmp.lt.s32.totalorder %s29, 3
          %s306 = scalar_select %p305, %s29, 3
          %s307 = smul.addr %s306, 3
          %s308 = smul.addr %s307, 4
          %s309 = scalar_lea.vmem %s2, %s308
        $region28: #{tpu_custom_call.1} parent=15 // pred_fallthru
          _
        // Predicated region
        $region29: #{tpu_custom_call.1} parent=15 // pred_check
          %p310 = pneg %p136
        $region30: #{tpu_custom_call.1} parent=15 // pred_check_branch
          %312 = sbr.rel (%p310) target = $region32
        $region31: #{tpu_custom_call.1} parent=15 // pred_region
          %p313 = scmp.lt.s32.totalorder %s29, 3
          %s314 = scalar_select %p313, %s29, 3
          %s315 = smul.addr %s314, 3
          %s316 = smul.addr %s315, 8
          %s317 = scalar_lea.vmem %s3, %s316
        $region32: #{tpu_custom_call.1} parent=15 // pred_fallthru
          _
        // Predicated region
        $region33: #{tpu_custom_call.1} parent=15 // pred_check
          %p318 = pneg %p162
        $region34: #{tpu_custom_call.1} parent=15 // pred_check_branch
          %320 = sbr.rel (%p318) target = $region36
        $region35: #{tpu_custom_call.1} parent=15 // pred_region
          %p321 = scmp.lt.s32.totalorder %s29, 3
          %s322 = scalar_select %p321, %s29, 3
          %s323 = smul.addr %s322, 4
          %s324 = scalar_lea.vmem %s4, %s323
        $region36: #{tpu_custom_call.1} parent=15 // pred_fallthru
          _
        // Predicated region
        $region37: #{tpu_custom_call.1} parent=15 // pred_check
          %p325 = pneg %p188
        $region38: #{tpu_custom_call.1} parent=15 // pred_check_branch
          %327 = sbr.rel (%p325) target = $region40
        $region39: #{tpu_custom_call.1} parent=15 // pred_region
          %p328 = scmp.lt.s32.totalorder %s29, 3
          %s329 = scalar_select %p328, %s29, 3
          %s330 = smul.addr %s329, 8
          %s331 = scalar_lea.vmem %s5, %s330
        $region40: #{tpu_custom_call.1} parent=15 // pred_fallthru
          _
        // Predicated region
        $region41: #{tpu_custom_call.1} parent=15 // pred_check
          %p332 = pneg %p214
        $region42: #{tpu_custom_call.1} parent=15 // pred_check_branch
          %334 = sbr.rel (%p332) target = $region44
        $region43: #{tpu_custom_call.1} parent=15 // pred_region
          %s335 = sand.u32 %s204, 1
          %s336 = scalar_lea.sflag [#allocation6], %s335
          %s337 = sand.u32 %s204, 1
          %s338 = smul.addr %s337, 64
          %s339 = scalar_lea.vmem [#allocation5], %s338
          %s341 = ssub.s32 1024, 1024
          %342 = vsyncadd %s336, %s341
          %s343 = smul.addr %s29, 16
          %s344 = smul.addr %s343, 64
          %s345 = scalar_lea.hbm %s6, %s344
          %s346 = sshll.u32 %s339, 4
          %s347 = int_to_ptr.vmem [resolvable:$true] %s346
          %352 = dma.hbm_to_vmem [thread:$0]  %s345, 1024, %s347, %s336, 128, 128, 8
        $region44: #{tpu_custom_call.1} parent=15 // pred_fallthru
          _
      $region16: #{tpu_custom_call.1} parent=5 // pred_fallthru
        _
      %p353 = scmp.le.s32.totalorder 1, %s22
      %p354 = scmp.lt.s32.totalorder %s22, 9
      %p355 = pnand %p353, %p354
      %p356 = pneg %p355
      // Predicated region
      $region45: #{tpu_custom_call.1} parent=5 // pred_check
        _
      $region46: #{tpu_custom_call.1} parent=5 // pred_check_branch
        %358 = sbr.rel (%p355) target = $region48
      $region47: #{tpu_custom_call.1} parent=5 // pred_region
        %s359 = ssub.s32 %s22, 1
        %s360 = sand.u32 %s77, 1
        %s361 = scalar_lea.sflag [#allocation3], %s360
        %s362 = sand.u32 %s77, 1
        %s363 = smul.addr %s362, 16
        %s364 = scalar_lea.vmem [#allocation2], %s363
        // Predicated region
        $region49: #{tpu_custom_call.1} parent=47 // pred_check
          %p365 = pneg %p90
        $region50: #{tpu_custom_call.1} parent=47 // pred_check_branch
          %367 = sbr.rel (%p365) target = $region52
        $region51: #{tpu_custom_call.1} parent=47 // pred_region
          %368 = dma.done %s361, 256
        $region52: #{tpu_custom_call.1} parent=47 // pred_fallthru
          _
        %s369 = sand.u32 %s207, 1
        %s370 = scalar_lea.sflag [#allocation6], %s369
        %s371 = sand.u32 %s207, 1
        %s372 = smul.addr %s371, 64
        %s373 = scalar_lea.vmem [#allocation5], %s372
        // Predicated region
        $region53: #{tpu_custom_call.1} parent=47 // pred_check
          %p374 = pneg %p220
        $region54: #{tpu_custom_call.1} parent=47 // pred_check_branch
          %376 = sbr.rel (%p374) target = $region56
        $region55: #{tpu_custom_call.1} parent=47 // pred_region
          %377 = dma.done %s370, 1024
        $region56: #{tpu_custom_call.1} parent=47 // pred_fallthru
          _
        %p378 = scmp.lt.s32.totalorder %s31, 3
        %s379 = scalar_select %p378, %s31, 3
        %p380 = scmp.lt.s32.totalorder %s32, 1
        %s381 = scalar_select %p380, %s32, 1
        %s382 = smul.addr %s381, 4
        %s383 = smul.addr %s379, 8
        %s384 = sadd.s32 %s382, %s383
        %s385 = smul.addr %s384, 4
        %s386 = scalar_lea.vmem %s0, %s385
        %p387 = pneg %p62
        %p388 = pneg %p59
        %s389 = sand.u32 %s77, 1
        %s390 = scalar_lea.sflag [#allocation3], %s389
        %s391 = sand.u32 %s77, 1
        %s392 = smul.addr %s391, 16
        %s393 = scalar_lea.vmem [#allocation2], %s392
        %p394 = pneg %p90
        %p395 = pneg %p87
        %p396 = scmp.lt.s32.totalorder %s31, 3
        %s397 = scalar_select %p396, %s31, 3
        %s398 = smul.addr %s397, 3
        %s399 = smul.addr %s398, 4
        %s400 = scalar_lea.vmem %s2, %s399
        %p401 = pneg %p116
        %p402 = pneg %p113
        %p403 = scmp.lt.s32.totalorder %s31, 3
        %s404 = scalar_select %p403, %s31, 3
        %s405 = smul.addr %s404, 3
        %s406 = smul.addr %s405, 8
        %s407 = scalar_lea.vmem %s3, %s406
        %p408 = pneg %p142
        %p409 = pneg %p139
        %p410 = scmp.lt.s32.totalorder %s31, 3
        %s411 = scalar_select %p410, %s31, 3
        %s412 = smul.addr %s411, 4
        %s413 = scalar_lea.vmem %s4, %s412
        %p414 = pneg %p168
        %p415 = pneg %p165
        %p416 = scmp.lt.s32.totalorder %s31, 3
        %s417 = scalar_select %p416, %s31, 3
        %s418 = smul.addr %s417, 8
        %s419 = scalar_lea.vmem %s5, %s418
        %p420 = pneg %p194
        %p421 = pneg %p191
        %s422 = sand.u32 %s207, 1
        %s423 = scalar_lea.sflag [#allocation6], %s422
        %s424 = sand.u32 %s207, 1
        %s425 = smul.addr %s424, 64
        %s426 = scalar_lea.vmem [#allocation5], %s425
        %p427 = pneg %p220
        %p428 = pneg %p217
        %p429 = pneg %p248
        %p430 = pneg %p245
        %s431 = sand.u32 %s235, 1
        %s432 = scalar_lea.sflag [#allocation4], %s431
        %s433 = sand.u32 %s235, 1
        %s434 = smul.addr %s433, 32
        %s435 = scalar_lea.vmem [#allocation7], %s434
        %p436 = scmp.lt.s32.totalorder %s31, 3
        %s437 = scalar_select %p436, %s31, 3
        %p438 = scmp.lt.s32.totalorder %s32, 1
        %s439 = scalar_select %p438, %s32, 1
        %s440 = smul.addr %s439, 4
        %s441 = smul.addr %s437, 8
        %s442 = sadd.s32 %s440, %s441
        %s443 = smul.addr %s442, 4
        %s444 = scalar_lea.vmem %s0, %s443
        %p445 = scmp.lt.s32.totalorder %s31, 3
        %s446 = scalar_select %p445, %s31, 3
        %s447 = smul.addr %s446, 3
        %s448 = smul.addr %s447, 4
        %s449 = scalar_lea.vmem %s2, %s448
        %p450 = scmp.lt.s32.totalorder %s31, 3
        %s451 = scalar_select %p450, %s31, 3
        %s452 = smul.addr %s451, 3
        %s453 = smul.addr %s452, 8
        %s454 = scalar_lea.vmem %s3, %s453
        %p455 = scmp.lt.s32.totalorder %s31, 3
        %s456 = scalar_select %p455, %s31, 3
        %s457 = smul.addr %s456, 4
        %s458 = scalar_lea.vmem %s4, %s457
        %p459 = scmp.lt.s32.totalorder %s31, 3
        %s460 = scalar_select %p459, %s31, 3
        %s461 = smul.addr %s460, 8
        %s462 = scalar_lea.vmem %s5, %s461
        %v464 = vld [vmem:[%s449] sm:$0xf]
        %v465 = vld [vmem:[%s449 + $0x4] sm:$0xf]
        %v466 = vld [vmem:[%s449 + $0x8] sm:$0xf]
        %v467 = vld [vmem:[%s444] sm:$0xff]
        %v468 = vld [vmem:[%s444 + $0x8] sm:$0xff]
        %v469 = vld [vmem:[%s454] sm:$0xff]
        %v470 = vld [vmem:[%s454 + $0x8] sm:$0xff]
        %v471 = vld [vmem:[%s454 + $0x10] sm:$0xff]
        %473 = vset.pattern.permute.xlu0 0
        %474 = vperm.xlu0 %473, %v469
        %v475 = vpop.permute.xlu0 %474
        %478 = vset.pattern.permute.xlu0 0
        %479 = vperm.xlu0 %478, %v470
        %v480 = vpop.permute.xlu0 %479
        %483 = vset.pattern.permute.xlu0 0
        %484 = vperm.xlu0 %483, %v471
        %v485 = vpop.permute.xlu0 %484
        %v490 = vunpack.c.l.b16 %v464
        %v491 = vunpack.c.l.b16 %v465
        %v492 = vunpack.c.l.b16 %v466
        %v493 = vpack.c.b16 %v491, %v490
        %v494 = vpack.c.b16 %v492, %v492
        %v497 = vunpack.c.l.b16 %v467
        %v498 = vunpack.c.h.b16 %v467
        %v499 = vunpack.c.l.b16 %v468
        %v500 = vunpack.c.h.b16 %v468
        %v501 = vpack.c.b16 %v499, %v497
        %v502 = vpack.c.b16 %v500, %v498
        %vm505 = vcmask 130048
        %v507 = vsel %vm505, %v493, 0
        %v510 = vsel %vm505, %v494, 0
        %512 = vmatprep.subr.bf16.mxu0 %v502
        %513 = vmatpush1.bf16.msra.mxu0 %v501
        %514 = vmatprep.subr.bf16.mxu0 0
        %515 = vmatpush1.bf16.msra.mxu0 0
        %516 = vmatprep.subr.bf16.mxu0 0
        %517 = vmatpush1.bf16.msra.mxu0 0
        %518 = vmatprep.subr.bf16.mxu0 0
        %519 = vmatpush1.bf16.msra.mxu0 0
        %520 = vmatprep.subr.bf16.mxu0 0
        %521 = vmatpush1.bf16.msra.mxu0 0
        %522 = vmatprep.subr.bf16.mxu0 0
        %523 = vmatpush1.bf16.msra.mxu0 0
        %524 = vmatprep.subr.bf16.mxu0 0
        %525 = vmatpush1.bf16.msra.mxu0 0
        %526 = vmatprep.subr.bf16.mxu0 0
        %527 = vmatpush1.bf16.msra.mxu0 0
        %528 = vmatprep.subr.bf16.mxu0 0
        %529 = vmatpush1.bf16.msra.mxu0 0
        %530 = vmatprep.subr.bf16.mxu0 0
        %531 = vmatpush1.bf16.msra.mxu0 0
        %532 = vmatprep.subr.bf16.mxu0 0
        %533 = vmatpush1.bf16.msra.mxu0 0
        %534 = vmatprep.subr.bf16.mxu0 0
        %535 = vmatpush1.bf16.msra.mxu0 0
        %536 = vmatprep.subr.bf16.mxu0 0
        %537 = vmatpush1.bf16.msra.mxu0 0
        %538 = vmatprep.subr.bf16.mxu0 0
        %539 = vmatpush1.bf16.msra.mxu0 0
        %540 = vmatprep.subr.bf16.mxu0 0
        %541 = vmatpush1.bf16.msra.mxu0 0
        %542 = vmatprep.subr.bf16.mxu0 0
        %543 = vmatpush1.bf16.msra.mxu0 0
        %544 = vmatprep.mubr.bf16.mxu0 0
        %545 = vmatmul.mubr.bf16.gmra.mrb[0].mxu0 %v507
        %v546 = vpop.f32.mrb[0].mxu0
        %v547 = vadd.f32 %v475, %v546
        %v548 = vpop.f32.mrb[0].mxu0
        %v549 = vadd.f32 %v475, %v548
        %v550 = vpop.f32.mrb[0].mxu0
        %v551 = vadd.f32 %v480, %v550
        %v552 = vpop.f32.mrb[0].mxu0
        %v553 = vadd.f32 %v480, %v552
        %554 = vmatprep.mubr.bf16.mxu0 0
        %555 = vmatmul.mubr.bf16.gmra.mrb[0].mxu0 %v510
        %v556 = vpop.f32.mrb[0].mxu0
        %v557 = vadd.f32 %v485, %v556
        %v558 = vpop.f32.mrb[0].mxu0
        %v559 = vadd.f32 %v485, %v558
        %v560 = vpop.f32.mrb[0].mxu0
        %v561 = vpop.f32.mrb[0].mxu0
        %562 = vdwg.mxu0
        %v563 = vld [vmem:[%s458] sm:$0xf]
        %v564 = vld [vmem:[%s364] sm:$0xff]
        %v565 = vld [vmem:[%s364 + $0x8] sm:$0xff]
        %v566 = vld [vmem:[%s462] sm:$0xff]
        %568 = vset.pattern.permute.xlu0 0
        %569 = vperm.xlu0 %568, %v566
        %v570 = vpop.permute.xlu0 %569
        %v574 = vunpack.c.l.b16 %v564
        %v575 = vunpack.c.h.b16 %v564
        %v576 = vunpack.c.l.b16 %v565
        %v577 = vunpack.c.h.b16 %v565
        %v578 = vpack.c.b16 %v576, %v574
        %v579 = vpack.c.b16 %v577, %v575
        %v583 = vsel %vm505, %v563, 0
        %585 = vmatprep.subr.bf16.mxu0 %v579
        %586 = vmatpush1.bf16.msra.mxu0 %v578
        %587 = vmatprep.subr.bf16.mxu0 0
        %588 = vmatpush1.bf16.msra.mxu0 0
        %589 = vmatprep.subr.bf16.mxu0 0
        %590 = vmatpush1.bf16.msra.mxu0 0
        %591 = vmatprep.subr.bf16.mxu0 0
        %592 = vmatpush1.bf16.msra.mxu0 0
        %593 = vmatprep.subr.bf16.mxu0 0
        %594 = vmatpush1.bf16.msra.mxu0 0
        %595 = vmatprep.subr.bf16.mxu0 0
        %596 = vmatpush1.bf16.msra.mxu0 0
        %597 = vmatprep.subr.bf16.mxu0 0
        %598 = vmatpush1.bf16.msra.mxu0 0
        %599 = vmatprep.subr.bf16.mxu0 0
        %600 = vmatpush1.bf16.msra.mxu0 0
        %601 = vmatprep.subr.bf16.mxu0 0
        %602 = vmatpush1.bf16.msra.mxu0 0
        %603 = vmatprep.subr.bf16.mxu0 0
        %604 = vmatpush1.bf16.msra.mxu0 0
        %605 = vmatprep.subr.bf16.mxu0 0
        %606 = vmatpush1.bf16.msra.mxu0 0
        %607 = vmatprep.subr.bf16.mxu0 0
        %608 = vmatpush1.bf16.msra.mxu0 0
        %609 = vmatprep.subr.bf16.mxu0 0
        %610 = vmatpush1.bf16.msra.mxu0 0
        %611 = vmatprep.subr.bf16.mxu0 0
        %612 = vmatpush1.bf16.msra.mxu0 0
        %613 = vmatprep.subr.bf16.mxu0 0
        %614 = vmatpush1.bf16.msra.mxu0 0
        %615 = vmatprep.subr.bf16.mxu0 0
        %616 = vmatpush1.bf16.msra.mxu0 0
        %617 = vmatprep.mubr.bf16.mxu0 0
        %618 = vmatmul.mubr.bf16.gmra.mrb[0].mxu0 %v583
        %v619 = vpop.f32.mrb[0].mxu0
        %v620 = vadd.f32 %v570, %v619
        %v621 = vpop.f32.mrb[0].mxu0
        %v622 = vadd.f32 %v570, %v621
        %v623 = vpop.f32.mrb[0].mxu0
        %v624 = vpop.f32.mrb[0].mxu0
        %625 = vdwg.mxu0
        %v626 = vpack.c.bf16 %v551, %v547
        %v627 = vpack.c.bf16 %v553, %v549
        %v628 = vpack.c.bf16 %v557, %v557
        %v629 = vpack.c.bf16 %v559, %v559
        %v630 = vld [vmem:[%s373] sm:$0xff]
        %v631 = vld [vmem:[%s373 + $0x8] sm:$0xff]
        %v632 = vld [vmem:[%s373 + $0x10] sm:$0xff]
        %v633 = vld [vmem:[%s373 + $0x18] sm:$0xff]
        %v634 = vld [vmem:[%s373 + $0x20] sm:$0xff]
        %v635 = vld [vmem:[%s373 + $0x28] sm:$0xff]
        %v636 = vld [vmem:[%s373 + $0x30] sm:$0xff]
        %v637 = vld [vmem:[%s373 + $0x38] sm:$0xff]
        %v646 = vunpack.c.l.b16 %v630
        %v647 = vunpack.c.h.b16 %v630
        %v648 = vunpack.c.l.b16 %v631
        %v649 = vunpack.c.h.b16 %v631
        %v650 = vunpack.c.l.b16 %v632
        %v651 = vunpack.c.h.b16 %v632
        %v652 = vunpack.c.l.b16 %v633
        %v653 = vunpack.c.h.b16 %v633
        %v654 = vunpack.c.l.b16 %v634
        %v655 = vunpack.c.h.b16 %v634
        %v656 = vunpack.c.l.b16 %v635
        %v657 = vunpack.c.h.b16 %v635
        %v658 = vunpack.c.l.b16 %v636
        %v659 = vunpack.c.h.b16 %v636
        %v660 = vunpack.c.l.b16 %v637
        %v661 = vunpack.c.h.b16 %v637
        %v662 = vpack.c.b16 %v648, %v646
        %v663 = vpack.c.b16 %v649, %v647
        %v664 = vpack.c.b16 %v652, %v650
        %v665 = vpack.c.b16 %v653, %v651
        %v666 = vpack.c.b16 %v656, %v654
        %v667 = vpack.c.b16 %v657, %v655
        %v668 = vpack.c.b16 %v660, %v658
        %v669 = vpack.c.b16 %v661, %v659
        %678 = vmatprep.subr.bf16.mxu0 %v663
        %679 = vmatpush1.bf16.xpose.msra.mxu0 %v662
        %680 = vmatprep.subr.bf16.mxu0 %v665
        %681 = vmatpush1.bf16.xpose.msra.mxu0 %v664
        %682 = vmatprep.subr.bf16.mxu0 %v667
        %683 = vmatpush1.bf16.xpose.msra.mxu0 %v666
        %684 = vmatprep.subr.bf16.mxu0 %v669
        %685 = vmatpush1.bf16.xpose.msra.mxu0 %v668
        %686 = vmatprep.subr.bf16.mxu0 0
        %687 = vmatpush1.bf16.xpose.msra.mxu0 0
        %688 = vmatprep.subr.bf16.mxu0 0
        %689 = vmatpush1.bf16.xpose.msra.mxu0 0
        %690 = vmatprep.subr.bf16.mxu0 0
        %691 = vmatpush1.bf16.xpose.msra.mxu0 0
        %692 = vmatprep.subr.bf16.mxu0 0
        %693 = vmatpush1.bf16.xpose.msra.mxu0 0
        %694 = vmatprep.subr.bf16.mxu0 0
        %695 = vmatpush1.bf16.xpose.msra.mxu0 0
        %696 = vmatprep.subr.bf16.mxu0 0
        %697 = vmatpush1.bf16.xpose.msra.mxu0 0
        %698 = vmatprep.subr.bf16.mxu0 0
        %699 = vmatpush1.bf16.xpose.msra.mxu0 0
        %700 = vmatprep.subr.bf16.mxu0 0
        %701 = vmatpush1.bf16.xpose.msra.mxu0 0
        %702 = vmatprep.subr.bf16.mxu0 0
        %703 = vmatpush1.bf16.xpose.msra.mxu0 0
        %704 = vmatprep.subr.bf16.mxu0 0
        %705 = vmatpush1.bf16.xpose.msra.mxu0 0
        %706 = vmatprep.subr.bf16.mxu0 0
        %707 = vmatpush1.bf16.xpose.msra.mxu0 0
        %708 = vmatprep.subr.bf16.mxu0 0
        %709 = vmatpush1.bf16.xpose.msra.mxu0 0
        %710 = vmatprep.mubr.bf16.mxu0 %v627
        %711 = vmatmul.mubr.bf16.gmra.mrb[0].mxu0 %v626
        %v712 = vpop.f32.mrb[0].mxu0
        %v713 = vadd.f32 0.0, %v712
        %v714 = vpop.f32.mrb[0].mxu0
        %v715 = vpop.f32.mrb[0].mxu0
        %v716 = vadd.f32 0.0, %v715
        %v717 = vpop.f32.mrb[0].mxu0
        %718 = vmatprep.mubr.bf16.mxu0 %v629
        %719 = vmatmul.mubr.bf16.gmra.mrb[0].mxu0 %v628
        %v720 = vpop.f32.mrb[0].mxu0
        %v721 = vadd.f32 0.0, %v720
        %v722 = vpop.f32.mrb[0].mxu0
        %v723 = vpop.f32.mrb[0].mxu0
        %v724 = vpop.f32.mrb[0].mxu0
        %725 = vdwg.mxu0
        %v726 = vpack.c.bf16 %v721, %v721
        %v727 = vpack.c.bf16 %v620, %v620
        %v728 = vpack.c.bf16 %v622, %v622
        %729 = vxpose.xlu0.c.b16.start [1/8] %v726, 128
        %730 = vxpose.xlu0.c.b16.cont [2/8] 0, 128
        %731 = vxpose.xlu0.c.b16.cont [3/8] 0, 128
        %732 = vxpose.xlu0.c.b16.cont [4/8] 0, 128
        %733 = vxpose.xlu0.c.b16.cont [5/8] 0, 128
        %734 = vxpose.xlu0.c.b16.cont [6/8] 0, 128
        %735 = vxpose.xlu0.c.b16.cont [7/8] 0, 128
        %736 = vxpose.xlu0.c.b16.end [8/8] 0, 128
        %v737 = vpop.trf.xlu0
        %v738 = vpop.trf.xlu0
        %v739 = vpop.trf.xlu0
        %v740 = vpop.trf.xlu0
        %v741 = vpop.trf.xlu0
        %v742 = vpop.trf.xlu0
        %v743 = vpop.trf.xlu0
        %v744 = vpop.trf.xlu0
        %vm745 = vcmask 64512
        %v747 = vsel %vm745, %v737, 0
        %v750 = vsel %vm745, %v738, 0
        %v753 = vsel %vm745, %v739, 0
        %v756 = vsel %vm745, %v740, 0
        %vm758 = vcmask 1043456
        %v760 = vsel %vm758, %v727, 0
        %v763 = vsel %vm758, %v728, 0
        %765 = vmatprep.subr.bf16.mxu0 %v763
        %766 = vmatpush1.bf16.msra.mxu0 %v760
        %767 = vmatprep.subr.bf16.mxu0 0
        %768 = vmatpush1.bf16.msra.mxu0 0
        %769 = vmatprep.subr.bf16.mxu0 0
        %770 = vmatpush1.bf16.msra.mxu0 0
        %771 = vmatprep.subr.bf16.mxu0 0
        %772 = vmatpush1.bf16.msra.mxu0 0
        %773 = vmatprep.subr.bf16.mxu0 0
        %774 = vmatpush1.bf16.msra.mxu0 0
        %775 = vmatprep.subr.bf16.mxu0 0
        %776 = vmatpush1.bf16.msra.mxu0 0
        %777 = vmatprep.subr.bf16.mxu0 0
        %778 = vmatpush1.bf16.msra.mxu0 0
        %779 = vmatprep.subr.bf16.mxu0 0
        %780 = vmatpush1.bf16.msra.mxu0 0
        %781 = vmatprep.subr.bf16.mxu0 0
        %782 = vmatpush1.bf16.msra.mxu0 0
        %783 = vmatprep.subr.bf16.mxu0 0
        %784 = vmatpush1.bf16.msra.mxu0 0
        %785 = vmatprep.subr.bf16.mxu0 0
        %786 = vmatpush1.bf16.msra.mxu0 0
        %787 = vmatprep.subr.bf16.mxu0 0
        %788 = vmatpush1.bf16.msra.mxu0 0
        %789 = vmatprep.subr.bf16.mxu0 0
        %790 = vmatpush1.bf16.msra.mxu0 0
        %791 = vmatprep.subr.bf16.mxu0 0
        %792 = vmatpush1.bf16.msra.mxu0 0
        %793 = vmatprep.subr.bf16.mxu0 0
        %794 = vmatpush1.bf16.msra.mxu0 0
        %795 = vmatprep.subr.bf16.mxu0 0
        %796 = vmatpush1.bf16.msra.mxu0 0
        %797 = vmatprep.mubr.bf16.mxu0 0
        %798 = vmatmul.mubr.bf16.gmra.mrb[0].mxu0 %v747
        %v799 = vpop.f32.mrb[0].mxu0
        %v800 = vadd.f32 0.0, %v799
        %v801 = vpop.f32.mrb[0].mxu0
        %v802 = vadd.f32 0.0, %v801
        %v803 = vpop.f32.mrb[0].mxu0
        %v804 = vadd.f32 0.0, %v803
        %v805 = vpop.f32.mrb[0].mxu0
        %v806 = vadd.f32 0.0, %v805
        %807 = vmatprep.mubr.bf16.mxu0 0
        %808 = vmatmul.mubr.bf16.gmra.mrb[0].mxu0 %v750
        %v809 = vpop.f32.mrb[0].mxu0
        %v810 = vadd.f32 0.0, %v809
        %v811 = vpop.f32.mrb[0].mxu0
        %v812 = vadd.f32 0.0, %v811
        %v813 = vpop.f32.mrb[0].mxu0
        %v814 = vadd.f32 0.0, %v813
        %v815 = vpop.f32.mrb[0].mxu0
        %v816 = vadd.f32 0.0, %v815
        %817 = vmatprep.mubr.bf16.mxu0 0
        %818 = vmatmul.mubr.bf16.gmra.mrb[0].mxu0 %v753
        %v819 = vpop.f32.mrb[0].mxu0
        %v820 = vadd.f32 0.0, %v819
        %v821 = vpop.f32.mrb[0].mxu0
        %v822 = vadd.f32 0.0, %v821
        %v823 = vpop.f32.mrb[0].mxu0
        %v824 = vadd.f32 0.0, %v823
        %v825 = vpop.f32.mrb[0].mxu0
        %v826 = vadd.f32 0.0, %v825
        %827 = vmatprep.mubr.bf16.mxu0 0
        %828 = vmatmul.mubr.bf16.gmra.mrb[0].mxu0 %v756
        %v829 = vpop.f32.mrb[0].mxu0
        %v830 = vadd.f32 0.0, %v829
        %v831 = vpop.f32.mrb[0].mxu0
        %v832 = vadd.f32 0.0, %v831
        %v833 = vpop.f32.mrb[0].mxu0
        %v834 = vadd.f32 0.0, %v833
        %v835 = vpop.f32.mrb[0].mxu0
        %v836 = vadd.f32 0.0, %v835
        %837 = vdwg.mxu0
        %v838 = vmax.f32 %v800, %v802
        %839 = vmax.xlane.f32.xlu0 %v838
        %v840 = vpop.xlane.xlu0 %839
        %v841 = vmax.f32 %v804, %v806
        %842 = vmax.xlane.f32.xlu0 %v841
        %v843 = vpop.xlane.xlu0 %842
        %v844 = vmax.f32 %v810, %v812
        %845 = vmax.xlane.f32.xlu0 %v844
        %v846 = vpop.xlane.xlu0 %845
        %v847 = vmax.f32 %v814, %v816
        %848 = vmax.xlane.f32.xlu0 %v847
        %v849 = vpop.xlane.xlu0 %848
        %v850 = vmax.f32 %v820, %v822
        %851 = vmax.xlane.f32.xlu0 %v850
        %v852 = vpop.xlane.xlu0 %851
        %v853 = vmax.f32 %v824, %v826
        %854 = vmax.xlane.f32.xlu0 %v853
        %v855 = vpop.xlane.xlu0 %854
        %v856 = vmax.f32 %v830, %v832
        %857 = vmax.xlane.f32.xlu0 %v856
        %v858 = vpop.xlane.xlu0 %857
        %v859 = vmax.f32 %v834, %v836
        %860 = vmax.xlane.f32.xlu0 %v859
        %v861 = vpop.xlane.xlu0 %860
        %v862 = vsub.f32 %v800, %v840
        %v863 = vsub.f32 %v802, %v840
        %v864 = vsub.f32 %v804, %v843
        %v865 = vsub.f32 %v806, %v843
        %v866 = vsub.f32 %v810, %v846
        %v867 = vsub.f32 %v812, %v846
        %v868 = vsub.f32 %v814, %v849
        %v869 = vsub.f32 %v816, %v849
        %v870 = vsub.f32 %v820, %v852
        %v871 = vsub.f32 %v822, %v852
        %v872 = vsub.f32 %v824, %v855
        %v873 = vsub.f32 %v826, %v855
        %v874 = vsub.f32 %v830, %v858
        %v875 = vsub.f32 %v832, %v858
        %v876 = vsub.f32 %v834, %v861
        %v877 = vsub.f32 %v836, %v861
        %v878 = vmul.f32 %v862, 1.442695
        %v879 = vpow.pop %v878
        %v880 = vmul.f32 %v863, 1.442695
        %v881 = vpow.pop %v880
        %v882 = vmul.f32 %v864, 1.442695
        %v883 = vpow.pop %v882
        %v884 = vmul.f32 %v865, 1.442695
        %v885 = vpow.pop %v884
        %v886 = vmul.f32 %v866, 1.442695
        %v887 = vpow.pop %v886
        %v888 = vmul.f32 %v867, 1.442695
        %v889 = vpow.pop %v888
        %v890 = vmul.f32 %v868, 1.442695
        %v891 = vpow.pop %v890
        %v892 = vmul.f32 %v869, 1.442695
        %v893 = vpow.pop %v892
        %v894 = vmul.f32 %v870, 1.442695
        %v895 = vpow.pop %v894
        %v896 = vmul.f32 %v871, 1.442695
        %v897 = vpow.pop %v896
        %v898 = vmul.f32 %v872, 1.442695
        %v899 = vpow.pop %v898
        %v900 = vmul.f32 %v873, 1.442695
        %v901 = vpow.pop %v900
        %v902 = vmul.f32 %v874, 1.442695
        %v903 = vpow.pop %v902
        %v904 = vmul.f32 %v875, 1.442695
        %v905 = vpow.pop %v904
        %v906 = vmul.f32 %v876, 1.442695
        %v907 = vpow.pop %v906
        %v908 = vmul.f32 %v877, 1.442695
        %v909 = vpow.pop %v908
        %v910 = vadd.f32 %v879, %v881
        %911 = vadd.xlane.f32.xlu0 %v910
        %v912 = vpop.xlane.xlu0 %911
        %v913 = vadd.f32 %v883, %v885
        %914 = vadd.xlane.f32.xlu0 %v913
        %v915 = vpop.xlane.xlu0 %914
        %v916 = vadd.f32 %v887, %v889
        %917 = vadd.xlane.f32.xlu0 %v916
        %v918 = vpop.xlane.xlu0 %917
        %v919 = vadd.f32 %v891, %v893
        %920 = vadd.xlane.f32.xlu0 %v919
        %v921 = vpop.xlane.xlu0 %920
        %v922 = vadd.f32 %v895, %v897
        %923 = vadd.xlane.f32.xlu0 %v922
        %v924 = vpop.xlane.xlu0 %923
        %v925 = vadd.f32 %v899, %v901
        %926 = vadd.xlane.f32.xlu0 %v925
        %v927 = vpop.xlane.xlu0 %926
        %v928 = vadd.f32 %v903, %v905
        %929 = vadd.xlane.f32.xlu0 %v928
        %v930 = vpop.xlane.xlu0 %929
        %v931 = vadd.f32 %v907, %v909
        %932 = vadd.xlane.f32.xlu0 %v931
        %v933 = vpop.xlane.xlu0 %932
        %v934 = vrcp.pop %v912
        %v935 = vrcp.pop %v915
        %v936 = vrcp.pop %v918
        %v937 = vrcp.pop %v921
        %v938 = vrcp.pop %v924
        %v939 = vrcp.pop %v927
        %v940 = vrcp.pop %v930
        %v941 = vrcp.pop %v933
        %v942 = vmul.f32 %v879, %v934
        %v943 = vmul.f32 %v881, %v934
        %v944 = vmul.f32 %v883, %v935
        %v945 = vmul.f32 %v885, %v935
        %v946 = vmul.f32 %v887, %v936
        %v947 = vmul.f32 %v889, %v936
        %v948 = vmul.f32 %v891, %v937
        %v949 = vmul.f32 %v893, %v937
        %v950 = vmul.f32 %v895, %v938
        %v951 = vmul.f32 %v897, %v938
        %v952 = vmul.f32 %v899, %v939
        %v953 = vmul.f32 %v901, %v939
        %v954 = vmul.f32 %v903, %v940
        %v955 = vmul.f32 %v905, %v940
        %v956 = vmul.f32 %v907, %v941
        %v957 = vmul.f32 %v909, %v941
        %v958 = vpack.c.bf16 %v716, %v713
        %v959 = vpack.c.bf16 %v944, %v942
        %v960 = vpack.c.bf16 %v945, %v943
        %v961 = vpack.c.bf16 %v948, %v946
        %v962 = vpack.c.bf16 %v949, %v947
        %v963 = vpack.c.bf16 %v952, %v950
        %v964 = vpack.c.bf16 %v953, %v951
        %v965 = vpack.c.bf16 %v956, %v954
        %v966 = vpack.c.bf16 %v957, %v955
        %vm967 = vcmask 523264
        %v969 = vsel %vm967, %v958, 0
        %971 = vmatprep.subr.bf16.mxu0 %v960
        %972 = vmatpush1.bf16.msra.mxu0 %v959
        %973 = vmatprep.subr.bf16.mxu0 %v962
        %974 = vmatpush1.bf16.msra.mxu0 %v961
        %975 = vmatprep.subr.bf16.mxu0 %v964
        %976 = vmatpush1.bf16.msra.mxu0 %v963
        %977 = vmatprep.subr.bf16.mxu0 %v966
        %978 = vmatpush1.bf16.msra.mxu0 %v965
        %979 = vmatprep.subr.bf16.mxu0 0
        %980 = vmatpush1.bf16.msra.mxu0 0
        %981 = vmatprep.subr.bf16.mxu0 0
        %982 = vmatpush1.bf16.msra.mxu0 0
        %983 = vmatprep.subr.bf16.mxu0 0
        %984 = vmatpush1.bf16.msra.mxu0 0
        %985 = vmatprep.subr.bf16.mxu0 0
        %986 = vmatpush1.bf16.msra.mxu0 0
        %987 = vmatprep.subr.bf16.mxu0 0
        %988 = vmatpush1.bf16.msra.mxu0 0
        %989 = vmatprep.subr.bf16.mxu0 0
        %990 = vmatpush1.bf16.msra.mxu0 0
        %991 = vmatprep.subr.bf16.mxu0 0
        %992 = vmatpush1.bf16.msra.mxu0 0
        %993 = vmatprep.subr.bf16.mxu0 0
        %994 = vmatpush1.bf16.msra.mxu0 0
        %995 = vmatprep.subr.bf16.mxu0 0
        %996 = vmatpush1.bf16.msra.mxu0 0
        %997 = vmatprep.subr.bf16.mxu0 0
        %998 = vmatpush1.bf16.msra.mxu0 0
        %999 = vmatprep.subr.bf16.mxu0 0
        %1000 = vmatpush1.bf16.msra.mxu0 0
        %1001 = vmatprep.subr.bf16.mxu0 0
        %1002 = vmatpush1.bf16.msra.mxu0 0
        %1003 = vmatprep.mubr.bf16.mxu0 0
        %1004 = vmatmul.mubr.bf16.gmra.mrb[0].mxu0 %v969
        %v1005 = vpop.f32.mrb[0].mxu0
        %v1006 = vadd.f32 0.0, %v1005
        %v1007 = vpop.f32.mrb[0].mxu0
        %v1008 = vadd.f32 0.0, %v1007
        %v1009 = vpop.f32.mrb[0].mxu0
        %v1010 = vadd.f32 0.0, %v1009
        %v1011 = vpop.f32.mrb[0].mxu0
        %v1012 = vadd.f32 0.0, %v1011
        %1013 = vdwg.mxu0
        %1014 = vst [vmem:[%s435] sm:$0xff] %v1006
        %1015 = vst [vmem:[%s435 + $0x8] sm:$0xff] %v1008
        %1016 = vst [vmem:[%s435 + $0x10] sm:$0xff] %v1010
        %1017 = vst [vmem:[%s435 + $0x18] sm:$0xff] %v1012
        %s1018 = sand.u32 %s235, 1
        %s1019 = scalar_lea.sflag [#allocation4], %s1018
        %s1020 = sand.u32 %s235, 1
        %s1021 = smul.addr %s1020, 32
        %s1022 = scalar_lea.vmem [#allocation7], %s1021
        // Predicated region
        $region57: #{tpu_custom_call.1} parent=47 // pred_check
          %p1023 = pneg %p245
        $region58: #{tpu_custom_call.1} parent=47 // pred_check_branch
          %1025 = sbr.rel (%p1023) target = $region60
        $region59: #{tpu_custom_call.1} parent=47 // pred_region
          %s1027 = ssub.s32 512, 512
          %1028 = vsyncadd %s1019, %s1027
          %s1029 = smul.addr %s32, 4
          %s1030 = smul.addr %s31, 8
          %s1031 = sadd.s32 %s1029, %s1030
          %s1032 = smul.addr %s1031, 128
          %s1033 = scalar_lea.hbm %s7, %s1032
          %s1034 = sshll.u32 %s1022, 4
          %s1035 = int_to_ptr.vmem [resolvable:$true] %s1034
          %1040 = dma.vmem_to_hbm [thread:$0]  %s1035, 512, %s1033, %s1019, 256, 256, 16
        $region60: #{tpu_custom_call.1} parent=47 // pred_fallthru
          _
      $region48: #{tpu_custom_call.1} parent=5 // pred_fallthru
        _
      %p1041 = scmp.le.s32.totalorder 2, %s22
      // Predicated region
      $region61: #{tpu_custom_call.1} parent=5 // pred_check
        %p1042 = pneg %p1041
      $region62: #{tpu_custom_call.1} parent=5 // pred_check_branch
        %1044 = sbr.rel (%p1042) target = $region64
      $region63: #{tpu_custom_call.1} parent=5 // pred_region
        %s1045 = ssub.s32 %s22, 2
        // Predicated region
        $region65: #{tpu_custom_call.1} parent=63 // pred_check
          %p1046 = pneg %p251
        $region66: #{tpu_custom_call.1} parent=63 // pred_check_branch
          %1048 = sbr.rel (%p1046) target = $region68
        $region67: #{tpu_custom_call.1} parent=63 // pred_region
          %s1049 = sand.u32 %s236, 1
          %s1050 = scalar_lea.sflag [#allocation4], %s1049
          %s1051 = sand.u32 %s236, 1
          %s1052 = smul.addr %s1051, 32
          %s1053 = scalar_lea.vmem [#allocation7], %s1052
          %1054 = dma.done %s1050, 512
        $region68: #{tpu_custom_call.1} parent=63 // pred_fallthru
          _
      $region64: #{tpu_custom_call.1} parent=5 // pred_fallthru
        _
    $region6: #{tpu_custom_call.1} parent=1 // loop_footer
      %s26 = sadd.s32 1, %s22
    $region7: #{tpu_custom_call.1} parent=1 // loop_footer_branch
      %21 = sbr.rel target = $region3
    $region8: #{tpu_custom_call.1} parent=1 // loop_exit
      _
    %1055 = vsyncpa [#allocation3], 1
    %s1056 = scalar_lea.sflag [#allocation3], 1
    %1057 = vsyncpa %s1056, 1
    %1058 = vsyncpa [#allocation6], 1
    %s1059 = scalar_lea.sflag [#allocation6], 1
    %1060 = vsyncpa %s1059, 1
    %1061 = vsyncpa [#allocation4], 1
    %s1062 = scalar_lea.sflag [#allocation4], 1
    %1063 = vsyncpa %s1062, 1

</llo_original>
